<compile_context>
chip_gen: v7x
topology: tpu7x:2x2x1
jax: 0.10.0
libtpu: 0.0.40
codegen_flags: <defaults>
</compile_context>

<pallas_src>
import math
import functools

import jax
import jax.numpy as jnp
from jax import lax
from jax.experimental import pallas as pl
from jax.experimental.pallas import tpu as pltpu


# ----------------------------------------------------------------------------
# Fused kernel: LayerNorm -> x @ W1 + b1 -> ReLU -> @ W2 + b2
# ----------------------------------------------------------------------------
def ffn_kernel(x_ref, g_ref, beta_ref, w1_ref, b1_ref, w2_ref, b2_ref, o_ref,
               *, eps):
    x = x_ref[...].astype(jnp.float32)                      # [tm, d_model]

    # LayerNorm over the feature axis (biased variance, nn.LayerNorm-style).
    mean = jnp.mean(x, axis=-1, keepdims=True)
    xc = x - mean
    var = jnp.mean(xc * xc, axis=-1, keepdims=True)
    inv = lax.rsqrt(var + eps)                               # EUP slot
    xn = xc * inv * g_ref[...] + beta_ref[...]               # [tm, d_model]

    # Linear 1 + ReLU (MXU matmul, f32 accumulation).
    h = jnp.dot(xn, w1_ref[...], preferred_element_type=jnp.float32)
    h = jnp.maximum(h + b1_ref[...], 0.0)                    # [tm, d_ff]

    # Linear 2.
    y = jnp.dot(h, w2_ref[...], preferred_element_type=jnp.float32)
    o_ref[...] = (y + b2_ref[...]).astype(o_ref.dtype)       # [tm, d_model]


def pallas_ffn(x2d, gamma, beta, w1t, b1, w2t, b2, *, eps=1e-6, tile_m=256):
    """x2d: [M, d_model]; w1t: [d_model, d_ff]; w2t: [d_ff, d_model]."""
    M, d_model = x2d.shape
    d_ff = w1t.shape[1]
    tm = min(M, tile_m)
    grid = (pl.cdiv(M, tm),)

    kern = functools.partial(ffn_kernel, eps=eps)
    return pl.pallas_call(
        kern,
        out_shape=jax.ShapeDtypeStruct((M, d_model), x2d.dtype),
        grid_spec=pltpu.PrefetchScalarGridSpec(
            num_scalar_prefetch=0,
            grid=grid,
            in_specs=[
                pl.BlockSpec((tm, d_model), lambda i: (i, 0)),      # x tile
                pl.BlockSpec((1, d_model), lambda i: (0, 0)),       # LN gamma
                pl.BlockSpec((1, d_model), lambda i: (0, 0)),       # LN beta
                pl.BlockSpec((d_model, d_ff), lambda i: (0, 0)),    # W1^T
                pl.BlockSpec((1, d_ff), lambda i: (0, 0)),          # b1
                pl.BlockSpec((d_ff, d_model), lambda i: (0, 0)),    # W2^T
                pl.BlockSpec((1, d_model), lambda i: (0, 0)),       # b2
            ],
            out_specs=pl.BlockSpec((tm, d_model), lambda i: (i, 0)),
        ),
        compiler_params=pltpu.CompilerParams(
            dimension_semantics=("parallel",)),
    )(x2d, gamma, beta, w1t, b1, w2t, b2)


# ----------------------------------------------------------------------------
# Module wrapper
# ----------------------------------------------------------------------------
class PositionWiseFeedForwardPallas:
    def __init__(self, d_model, d_ff, key, eps=1e-6):
        self.d_model = d_model
        self.d_ff = d_ff
        self.eps = eps

        k1, k2, k3, k4 = jax.random.split(key, 4)

        # nn.Linear-style init: U(-1/sqrt(in_features), 1/sqrt(in_features)).
        b1_bound = 1.0 / math.sqrt(d_model)
        b2_bound = 1.0 / math.sqrt(d_ff)
        w1 = jax.random.uniform(k1, (d_ff, d_model), jnp.float32,
                                -b1_bound, b1_bound)
        b1 = jax.random.uniform(k2, (d_ff,), jnp.float32, -b1_bound, b1_bound)
        w2 = jax.random.uniform(k3, (d_model, d_ff), jnp.float32,
                                -b2_bound, b2_bound)
        b2 = jax.random.uniform(k4, (d_model,), jnp.float32,
                                -b2_bound, b2_bound)

        # Pre-transpose / pre-reshape once (hoisted out of the forward path).
        self.w1t = jnp.asarray(w1.T)                # [d_model, d_ff]
        self.b1 = b1.reshape(1, d_ff)
        self.w2t = jnp.asarray(w2.T)                # [d_ff, d_model]
        self.b2 = b2.reshape(1, d_model)

        # LayerNorm params (ones / zeros init, eps=1e-6).
        self.gamma = jnp.ones((1, d_model), jnp.float32)
        self.beta = jnp.zeros((1, d_model), jnp.float32)

    def __call__(self, x):
        B, S, D = x.shape
        y = pallas_ffn(x.reshape(B * S, D), self.gamma, self.beta,
                       self.w1t, self.b1, self.w2t, self.b2, eps=self.eps)
        return y.reshape(B, S, D)


# ----------------------------------------------------------------------------
def _reference(ffn, x):
    """Pure-JAX reference for sanity check."""
    mean = jnp.mean(x, axis=-1, keepdims=True)
    xc = x - mean
    var = jnp.mean(xc * xc, axis=-1, keepdims=True)
    xn = xc / jnp.sqrt(var + ffn.eps) * ffn.gamma[0] + ffn.beta[0]
    h = jnp.maximum(xn @ ffn.w1t + ffn.b1[0], 0.0)
    return h @ ffn.w2t + ffn.b2[0]


if __name__ == "__main__":
    B, S, d_model, d_ff = 2, 8, 32, 128

    root = jax.random.PRNGKey(0)
    kp, kx = jax.random.split(root, 2)

    ffn = PositionWiseFeedForwardPallas(d_model, d_ff, kp)
    x = jax.random.normal(kx, (B, S, d_model), jnp.float32)

    out = ffn(x)
    out = jax.block_until_ready(out)

    ref = _reference(ffn, x)
    assert out.shape == (B, S, d_model)
    assert jnp.allclose(out, ref, atol=1e-4, rtol=1e-4)

    print("KERNEL_OK")
</pallas_src>

<mosaic_0001>
module attributes {stable_mosaic.version = 11 : i64} {
  func.func @ffn_kernel(%arg0: i32, %arg1: memref<16x32xf32, #tpu.memory_space<vmem>>, %arg2: memref<1x32xf32, #tpu.memory_space<vmem>>, %arg3: memref<1x32xf32, #tpu.memory_space<vmem>>, %arg4: memref<32x128xf32, #tpu.memory_space<vmem>>, %arg5: memref<1x128xf32, #tpu.memory_space<vmem>>, %arg6: memref<128x32xf32, #tpu.memory_space<vmem>>, %arg7: memref<1x32xf32, #tpu.memory_space<vmem>>, %arg8: memref<16x32xf32, #tpu.memory_space<vmem>>) attributes {dimension_semantics = [#tpu.dimension_semantics<parallel>], iteration_bounds = array<i64: 1>, scalar_prefetch = 0 : i64, scratch_operands = 0 : i64, tpu.core_type = #tpu.core_type<tc>, window_params = [{transform_indices = @transform_0, window_bounds = array<i64: 16, 32>}, {pipeline_mode = #tpu.pipeline_mode<synchronous>, transform_indices = @transform_1, window_bounds = array<i64: 1, 32>}, {pipeline_mode = #tpu.pipeline_mode<synchronous>, transform_indices = @transform_2, window_bounds = array<i64: 1, 32>}, {pipeline_mode = #tpu.pipeline_mode<synchronous>, transform_indices = @transform_3, window_bounds = array<i64: 32, 128>}, {pipeline_mode = #tpu.pipeline_mode<synchronous>, transform_indices = @transform_4, window_bounds = array<i64: 1, 128>}, {pipeline_mode = #tpu.pipeline_mode<synchronous>, transform_indices = @transform_5, window_bounds = array<i64: 128, 32>}, {pipeline_mode = #tpu.pipeline_mode<synchronous>, transform_indices = @transform_6, window_bounds = array<i64: 1, 32>}, {transform_indices = @transform_7, window_bounds = array<i64: 16, 32>}]} {
    %c0 = arith.constant 0 : index
    %c0_0 = arith.constant 0 : index
    %0 = vector.load %arg1[%c0, %c0_0] : memref<16x32xf32, #tpu.memory_space<vmem>>, vector<16x32xf32>
    %cst = arith.constant dense<0.000000e+00> : vector<16xf32>
    %1 = vector.multi_reduction <add>, %0, %cst [1] : vector<16x32xf32> to vector<16xf32>
    %2 = vector.shape_cast %1 : vector<16xf32> to vector<16x1xf32>
    %cst_1 = arith.constant 3.200000e+01 : f32
    %3 = vector.broadcast %cst_1 : f32 to vector<16x1xf32>
    %4 = arith.divf %2, %3 : vector<16x1xf32>
    %5 = vector.broadcast %4 : vector<16x1xf32> to vector<16x32xf32>
    %6 = arith.subf %0, %5 : vector<16x32xf32>
    %7 = arith.mulf %6, %6 : vector<16x32xf32>
    %cst_2 = arith.constant dense<0.000000e+00> : vector<16xf32>
    %8 = vector.multi_reduction <add>, %7, %cst_2 [1] : vector<16x32xf32> to vector<16xf32>
    %9 = vector.shape_cast %8 : vector<16xf32> to vector<16x1xf32>
    %cst_3 = arith.constant 3.200000e+01 : f32
    %10 = vector.broadcast %cst_3 : f32 to vector<16x1xf32>
    %11 = arith.divf %9, %10 : vector<16x1xf32>
    %cst_4 = arith.constant 9.99999997E-7 : f32
    %12 = vector.broadcast %cst_4 : f32 to vector<16x1xf32>
    %13 = arith.addf %11, %12 : vector<16x1xf32>
    %14 = math.rsqrt %13 : vector<16x1xf32>
    %15 = vector.broadcast %14 : vector<16x1xf32> to vector<16x32xf32>
    %16 = arith.mulf %6, %15 : vector<16x32xf32>
    %c0_5 = arith.constant 0 : index
    %c0_6 = arith.constant 0 : index
    %17 = vector.load %arg2[%c0_5, %c0_6] : memref<1x32xf32, #tpu.memory_space<vmem>>, vector<1x32xf32>
    %18 = vector.broadcast %17 : vector<1x32xf32> to vector<16x32xf32>
    %19 = arith.mulf %16, %18 : vector<16x32xf32>
    %c0_7 = arith.constant 0 : index
    %c0_8 = arith.constant 0 : index
    %20 = vector.load %arg3[%c0_7, %c0_8] : memref<1x32xf32, #tpu.memory_space<vmem>>, vector<1x32xf32>
    %21 = vector.broadcast %20 : vector<1x32xf32> to vector<16x32xf32>
    %22 = arith.addf %19, %21 : vector<16x32xf32>
    %c0_9 = arith.constant 0 : index
    %c0_10 = arith.constant 0 : index
    %23 = vector.load %arg4[%c0_9, %c0_10] : memref<32x128xf32, #tpu.memory_space<vmem>>, vector<32x128xf32>
    %cst_11 = arith.constant dense<0.000000e+00> : vector<16x128xf32>
    %24 = tpu.matmul %22, %23, %cst_11 {dimension_numbers = #tpu.dot_dimension_numbers<[1], [0], [0], [1], [0, 0, 1, 1], [], []>} : vector<16x32xf32>, vector<32x128xf32>, vector<16x128xf32> -> vector<16x128xf32>
    %c0_12 = arith.constant 0 : index
    %c0_13 = arith.constant 0 : index
    %25 = vector.load %arg5[%c0_12, %c0_13] : memref<1x128xf32, #tpu.memory_space<vmem>>, vector<1x128xf32>
    %26 = vector.broadcast %25 : vector<1x128xf32> to vector<16x128xf32>
    %27 = arith.addf %24, %26 : vector<16x128xf32>
    %cst_14 = arith.constant 0.000000e+00 : f32
    %28 = vector.broadcast %cst_14 : f32 to vector<16x128xf32>
    %29 = arith.maximumf %27, %28 : vector<16x128xf32>
    %c0_15 = arith.constant 0 : index
    %c0_16 = arith.constant 0 : index
    %30 = vector.load %arg6[%c0_15, %c0_16] : memref<128x32xf32, #tpu.memory_space<vmem>>, vector<128x32xf32>
    %cst_17 = arith.constant dense<0.000000e+00> : vector<16x32xf32>
    %31 = tpu.matmul %29, %30, %cst_17 {dimension_numbers = #tpu.dot_dimension_numbers<[1], [0], [0], [1], [0, 0, 1, 1], [], []>} : vector<16x128xf32>, vector<128x32xf32>, vector<16x32xf32> -> vector<16x32xf32>
    %c0_18 = arith.constant 0 : index
    %c0_19 = arith.constant 0 : index
    %32 = vector.load %arg7[%c0_18, %c0_19] : memref<1x32xf32, #tpu.memory_space<vmem>>, vector<1x32xf32>
    %33 = vector.broadcast %32 : vector<1x32xf32> to vector<16x32xf32>
    %34 = arith.addf %31, %33 : vector<16x32xf32>
    %c0_20 = arith.constant 0 : index
    %c0_21 = arith.constant 0 : index
    %35 = vector.load %arg8[%c0_20, %c0_21] : memref<16x32xf32, #tpu.memory_space<vmem>>, vector<16x32xf32>
    tpu.vector_store %arg8[%c0_20, %c0_21], %34 {strides = array<i32>} : memref<16x32xf32, #tpu.memory_space<vmem>>, vector<16x32xf32>,
    return
  }
  func.func @transform_0(%arg0: i32) -> (i32, i32) {
    %c0_i32 = arith.constant 0 : i32
    %c0_i32_0 = arith.constant 0 : i32
    return %arg0, %c0_i32 : i32, i32
  }
  func.func @transform_1(%arg0: i32) -> (i32, i32) {
    %c0_i32 = arith.constant 0 : i32
    %c0_i32_0 = arith.constant 0 : i32
    %c0_i32_1 = arith.constant 0 : i32
    return %c0_i32, %c0_i32_0 : i32, i32
  }
  func.func @transform_2(%arg0: i32) -> (i32, i32) {
    %c0_i32 = arith.constant 0 : i32
    %c0_i32_0 = arith.constant 0 : i32
    %c0_i32_1 = arith.constant 0 : i32
    return %c0_i32, %c0_i32_0 : i32, i32
  }
  func.func @transform_3(%arg0: i32) -> (i32, i32) {
    %c0_i32 = arith.constant 0 : i32
    %c0_i32_0 = arith.constant 0 : i32
    %c0_i32_1 = arith.constant 0 : i32
    return %c0_i32, %c0_i32_0 : i32, i32
  }
  func.func @transform_4(%arg0: i32) -> (i32, i32) {
    %c0_i32 = arith.constant 0 : i32
    %c0_i32_0 = arith.constant 0 : i32
    %c0_i32_1 = arith.constant 0 : i32
    return %c0_i32, %c0_i32_0 : i32, i32
  }
  func.func @transform_5(%arg0: i32) -> (i32, i32) {
    %c0_i32 = arith.constant 0 : i32
    %c0_i32_0 = arith.constant 0 : i32
    %c0_i32_1 = arith.constant 0 : i32
    return %c0_i32, %c0_i32_0 : i32, i32
  }
  func.func @transform_6(%arg0: i32) -> (i32, i32) {
    %c0_i32 = arith.constant 0 : i32
    %c0_i32_0 = arith.constant 0 : i32
    %c0_i32_1 = arith.constant 0 : i32
    return %c0_i32, %c0_i32_0 : i32, i32
  }
  func.func @transform_7(%arg0: i32) -> (i32, i32) {
    %c0_i32 = arith.constant 0 : i32
    %c0_i32_0 = arith.constant 0 : i32
    return %arg0, %c0_i32 : i32, i32
  }
}

</mosaic_0001>

<llo_original>
// kernel: tpu_custom_call.1
$region0: #{tpu_custom_call.1}
  #allocation0 [shape = 'u32[]', space=smem, size = 0x4, offset = 0x4, fixed_abs, tag = 'smem constant byte address 0x4 - core index']
  #allocation1 [shape = 'u32[144,128]{1,0:T(1,128)}', space=vmem, size = 0x12000, scoped, tag = 'internal scratch']
  %s0 = inlined_call_operand.vmem [shape: f32[16,32], index: 0, kind: input, shape index: {}]
  %s1 = inlined_call_operand.vmem [shape: f32[1,32], index: 1, kind: input, shape index: {}]
  %s2 = inlined_call_operand.vmem [shape: f32[1,32], index: 2, kind: input, shape index: {}]
  %s3 = inlined_call_operand.vmem [shape: f32[32,128], index: 3, kind: input, shape index: {}]
  %s4 = inlined_call_operand.vmem [shape: f32[1,128], index: 4, kind: input, shape index: {}]
  %s5 = inlined_call_operand.vmem [shape: f32[128,32], index: 5, kind: input, shape index: {}]
  %s6 = inlined_call_operand.vmem [shape: f32[1,32], index: 6, kind: input, shape index: {}]
  %s7 = inlined_call_operand.hbm [shape: f32[16,32], index: 7, kind: output, shape index: {}]
  %s8 = sld [smem:[#allocation0]]
  $region38: #{tpu_custom_call.1} parent=0
    _
  %s10 = ssub.s32 1, %s8
  %s11 = scalar_select 0, %s10, %s8
  $region1: #{tpu_custom_call.1} parent=0
    #allocation2 [shape = 'u8[8192]{0}', space=vmem, size = 0x2000, scoped, tag = 'output window, operand 0, single buffered']
    #allocation3 [shape = 's32[1]{0}', space=sflag, size = 0x4, scoped, tag = 'scoped memory for tpu_custom_call.1']
    %12 = vsyncpa [#allocation3], 0
    // Predicated region
    $region2: #{tpu_custom_call.1} parent=1 // pred_check
      _
    $region3: #{tpu_custom_call.1} parent=1 // pred_check_branch
      %14 = sbr.rel (0) target = $region5
    $region4: #{tpu_custom_call.1} parent=1 // pred_region
      _
    $region5: #{tpu_custom_call.1} parent=1 // pred_fallthru
      _
    // Predicated region
    $region6: #{tpu_custom_call.1} parent=1 // pred_check
      _
    $region7: #{tpu_custom_call.1} parent=1 // pred_check_branch
      %16 = sbr.rel (0) target = $region9
    $region8: #{tpu_custom_call.1} parent=1 // pred_region
      _
    $region9: #{tpu_custom_call.1} parent=1 // pred_fallthru
      _
    // Predicated region
    $region10: #{tpu_custom_call.1} parent=1 // pred_check
      _
    $region11: #{tpu_custom_call.1} parent=1 // pred_check_branch
      %18 = sbr.rel (0) target = $region13
    $region12: #{tpu_custom_call.1} parent=1 // pred_region
      _
    $region13: #{tpu_custom_call.1} parent=1 // pred_fallthru
      _
    // Predicated region
    $region14: #{tpu_custom_call.1} parent=1 // pred_check
      _
    $region15: #{tpu_custom_call.1} parent=1 // pred_check_branch
      %20 = sbr.rel (0) target = $region17
    $region16: #{tpu_custom_call.1} parent=1 // pred_region
      _
    $region17: #{tpu_custom_call.1} parent=1 // pred_fallthru
      _
    // Predicated region
    $region18: #{tpu_custom_call.1} parent=1 // pred_check
      _
    $region19: #{tpu_custom_call.1} parent=1 // pred_check_branch
      %22 = sbr.rel (0) target = $region21
    $region20: #{tpu_custom_call.1} parent=1 // pred_region
      _
    $region21: #{tpu_custom_call.1} parent=1 // pred_fallthru
      _
    // Predicated region
    $region22: #{tpu_custom_call.1} parent=1 // pred_check
      _
    $region23: #{tpu_custom_call.1} parent=1 // pred_check_branch
      %24 = sbr.rel (0) target = $region25
    $region24: #{tpu_custom_call.1} parent=1 // pred_region
      _
    $region25: #{tpu_custom_call.1} parent=1 // pred_fallthru
      _
    // Predicated region
    $region26: #{tpu_custom_call.1} parent=1 // pred_check
      _
    $region27: #{tpu_custom_call.1} parent=1 // pred_check_branch
      %26 = sbr.rel (0) target = $region29
    $region28: #{tpu_custom_call.1} parent=1 // pred_region
      _
    $region29: #{tpu_custom_call.1} parent=1 // pred_fallthru
      _
    %v27 = vld [vmem:[%s0] sm:$0xff]
    %v28 = vld [vmem:[%s0 + $0x8] sm:$0xff]
    %vm29 = vcmask 261120
    %v30 = vsel %vm29, %v27, 0.0
    %31 = vadd.xlane.f32.xlu0 %v30
    %v32 = vpop.xlane.xlu0 %31
    %v33 = vsel %vm29, %v28, 0.0
    %34 = vadd.xlane.f32.xlu0 %v33
    %v35 = vpop.xlane.xlu0 %34
    %v36 = vrcp.pop 32.0
    %v37 = vmul.f32 %v32, %v36
    %v38 = vmul.f32 %v35, %v36
    %v39 = vsub.f32 %v27, %v37
    %v40 = vsub.f32 %v28, %v38
    %v41 = vmul.f32 %v39, %v39
    %v42 = vmul.f32 %v40, %v40
    %v43 = vsel %vm29, %v41, 0.0
    %44 = vadd.xlane.f32.xlu0 %v43
    %v45 = vpop.xlane.xlu0 %44
    %v46 = vsel %vm29, %v42, 0.0
    %47 = vadd.xlane.f32.xlu0 %v46
    %v48 = vpop.xlane.xlu0 %47
    %v49 = vmul.f32 %v45, %v36
    %v50 = vmul.f32 %v48, %v36
    %v51 = vadd.f32 %v49, 1e-06
    %v52 = vadd.f32 %v50, 1e-06
    %v53 = vrsqrt.pop %v51
    %v54 = vrsqrt.pop %v52
    %v55 = vmul.f32 %v39, %v53
    %v56 = vmul.f32 %v40, %v54
    %v57 = vld [vmem:[%s1] sm:$0x1]
    %v59 = vlaneseq
    %v60 = vshrl.u32 %v59, 7
    %v61 = vsub.s32 0, %v60
    %v62 = vrot.slane %v57, %v61
    %v64 = vmul.f32 %v55, %v62
    %v65 = vmul.f32 %v56, %v62
    %v66 = vld [vmem:[%s2] sm:$0x1]
    %v68 = vlaneseq
    %v69 = vshrl.u32 %v68, 7
    %v70 = vsub.s32 0, %v69
    %v71 = vrot.slane %v66, %v70
    %v73 = vadd.f32 %v64, %v71
    %v74 = vadd.f32 %v65, %v71
    %v75 = vld [vmem:[%s3] sm:$0xff]
    %v76 = vld [vmem:[%s3 + $0x8] sm:$0xff]
    %v77 = vld [vmem:[%s3 + $0x10] sm:$0xff]
    %v78 = vld [vmem:[%s3 + $0x18] sm:$0xff]
    %v79 = vld [vmem:[%s4] sm:$0x1]
    %v81 = vlaneseq
    %v82 = vshrl.u32 %v81, 7
    %v83 = vsub.s32 0, %v82
    %v84 = vrot.slane %v79, %v83
    %v87 = vsel %vm29, %v73, 0
    %v90 = vsel %vm29, %v74, 0
    %92 = vmatprep.subr.mxu0 0.0
    %93 = vmatpush1.msra.mxu0 %v75
    %94 = vmatprep.subr.mxu0 0.0
    %95 = vmatpush1.msra.mxu0 %v76
    %96 = vmatprep.subr.mxu0 0.0
    %97 = vmatpush1.msra.mxu0 %v77
    %98 = vmatprep.subr.mxu0 0.0
    %99 = vmatpush1.msra.mxu0 %v78
    %100 = vmatprep.subr.mxu0 0.0
    %101 = vmatpush1.msra.mxu0 0.0
    %102 = vmatprep.subr.mxu0 0.0
    %103 = vmatpush1.msra.mxu0 0.0
    %104 = vmatprep.subr.mxu0 0.0
    %105 = vmatpush1.msra.mxu0 0.0
    %106 = vmatprep.subr.mxu0 0.0
    %107 = vmatpush1.msra.mxu0 0.0
    %108 = vmatprep.subr.mxu0 0.0
    %109 = vmatpush1.msra.mxu0 0.0
    %110 = vmatprep.subr.mxu0 0.0
    %111 = vmatpush1.msra.mxu0 0.0
    %112 = vmatprep.subr.mxu0 0.0
    %113 = vmatpush1.msra.mxu0 0.0
    %114 = vmatprep.subr.mxu0 0.0
    %115 = vmatpush1.msra.mxu0 0.0
    %116 = vmatprep.subr.mxu0 0.0
    %117 = vmatpush1.msra.mxu0 0.0
    %118 = vmatprep.subr.mxu0 0.0
    %119 = vmatpush1.msra.mxu0 0.0
    %120 = vmatprep.subr.mxu0 0.0
    %121 = vmatpush1.msra.mxu0 0.0
    %122 = vmatprep.subr.mxu0 0.0
    %123 = vmatpush1.msra.mxu0 0.0
    %124 = vmatprep.subr.mxu0 0.0
    %125 = vmatpush1.msra.mxu0 0.0
    %126 = vmatprep.subr.mxu0 0.0
    %127 = vmatpush1.msra.mxu0 0.0
    %128 = vmatprep.subr.mxu0 0.0
    %129 = vmatpush1.msra.mxu0 0.0
    %130 = vmatprep.subr.mxu0 0.0
    %131 = vmatpush1.msra.mxu0 0.0
    %132 = vmatprep.subr.mxu0 0.0
    %133 = vmatpush1.msra.mxu0 0.0
    %134 = vmatprep.subr.mxu0 0.0
    %135 = vmatpush1.msra.mxu0 0.0
    %136 = vmatprep.subr.mxu0 0.0
    %137 = vmatpush1.msra.mxu0 0.0
    %138 = vmatprep.subr.mxu0 0.0
    %139 = vmatpush1.msra.mxu0 0.0
    %140 = vmatprep.subr.mxu0 0.0
    %141 = vmatpush1.msra.mxu0 0.0
    %142 = vmatprep.subr.mxu0 0.0
    %143 = vmatpush1.msra.mxu0 0.0
    %144 = vmatprep.subr.mxu0 0.0
    %145 = vmatpush1.msra.mxu0 0.0
    %146 = vmatprep.subr.mxu0 0.0
    %147 = vmatpush1.msra.mxu0 0.0
    %148 = vmatprep.subr.mxu0 0.0
    %149 = vmatpush1.msra.mxu0 0.0
    %150 = vmatprep.subr.mxu0 0.0
    %151 = vmatpush1.msra.mxu0 0.0
    %152 = vmatprep.subr.mxu0 0.0
    %153 = vmatpush1.msra.mxu0 0.0
    %154 = vmatprep.subr.mxu0 0.0
    %155 = vmatpush1.msra.mxu0 0.0
    %156 = vmatprep.mubr.f32.mxu0 0.0
    %157 = vmatmul.mubr.f32.gmra.mrb[0].mxu0 %v87
    %v158 = vpop.f32.mrb[0].mxu0
    %v159 = vadd.f32 %v84, %v158
    %v160 = vpop.f32.mrb[0].mxu0
    %161 = vmatprep.mubr.f32.mxu0 0.0
    %162 = vmatmul.mubr.f32.gmra.mrb[0].mxu0 %v90
    %v163 = vpop.f32.mrb[0].mxu0
    %v164 = vadd.f32 %v84, %v163
    %v165 = vpop.f32.mrb[0].mxu0
    %166 = vdwg.mxu0
    %v167 = vmax.f32 %v159, 0.0
    %v168 = vmax.f32 %v164, 0.0
    %v169 = vld [vmem:[%s5] sm:$0xff]
    %v170 = vld [vmem:[%s5 + $0x8] sm:$0xff]
    %v171 = vld [vmem:[%s5 + $0x10] sm:$0xff]
    %v172 = vld [vmem:[%s5 + $0x18] sm:$0xff]
    %v173 = vld [vmem:[%s5 + $0x20] sm:$0xff]
    %v174 = vld [vmem:[%s5 + $0x28] sm:$0xff]
    %v175 = vld [vmem:[%s5 + $0x30] sm:$0xff]
    %v176 = vld [vmem:[%s5 + $0x38] sm:$0xff]
    %v177 = vld [vmem:[%s5 + $0x40] sm:$0xff]
    %v178 = vld [vmem:[%s5 + $0x48] sm:$0xff]
    %v179 = vld [vmem:[%s5 + $0x50] sm:$0xff]
    %v180 = vld [vmem:[%s5 + $0x58] sm:$0xff]
    %v181 = vld [vmem:[%s5 + $0x60] sm:$0xff]
    %v182 = vld [vmem:[%s5 + $0x68] sm:$0xff]
    %v183 = vld [vmem:[%s5 + $0x70] sm:$0xff]
    %v184 = vld [vmem:[%s5 + $0x78] sm:$0xff]
    %v185 = vld [vmem:[%s6] sm:$0x1]
    %v187 = vlaneseq
    %v188 = vshrl.u32 %v187, 7
    %v189 = vsub.s32 0, %v188
    %v190 = vrot.slane %v185, %v189
    %192 = vmatprep.subr.mxu0 0.0
    %193 = vmatpush1.msra.mxu0 %v169
    %194 = vmatprep.subr.mxu0 0.0
    %195 = vmatpush1.msra.mxu0 %v170
    %196 = vmatprep.subr.mxu0 0.0
    %197 = vmatpush1.msra.mxu0 %v171
    %198 = vmatprep.subr.mxu0 0.0
    %199 = vmatpush1.msra.mxu0 %v172
    %200 = vmatprep.subr.mxu0 0.0
    %201 = vmatpush1.msra.mxu0 %v173
    %202 = vmatprep.subr.mxu0 0.0
    %203 = vmatpush1.msra.mxu0 %v174
    %204 = vmatprep.subr.mxu0 0.0
    %205 = vmatpush1.msra.mxu0 %v175
    %206 = vmatprep.subr.mxu0 0.0
    %207 = vmatpush1.msra.mxu0 %v176
    %208 = vmatprep.subr.mxu0 0.0
    %209 = vmatpush1.msra.mxu0 %v177
    %210 = vmatprep.subr.mxu0 0.0
    %211 = vmatpush1.msra.mxu0 %v178
    %212 = vmatprep.subr.mxu0 0.0
    %213 = vmatpush1.msra.mxu0 %v179
    %214 = vmatprep.subr.mxu0 0.0
    %215 = vmatpush1.msra.mxu0 %v180
    %216 = vmatprep.subr.mxu0 0.0
    %217 = vmatpush1.msra.mxu0 %v181
    %218 = vmatprep.subr.mxu0 0.0
    %219 = vmatpush1.msra.mxu0 %v182
    %220 = vmatprep.subr.mxu0 0.0
    %221 = vmatpush1.msra.mxu0 %v183
    %222 = vmatprep.subr.mxu0 0.0
    %223 = vmatpush1.msra.mxu0 %v184
    %224 = vmatprep.subr.mxu0 0.0
    %225 = vmatpush1.msra.mxu0 0.0
    %226 = vmatprep.subr.mxu0 0.0
    %227 = vmatpush1.msra.mxu0 0.0
    %228 = vmatprep.subr.mxu0 0.0
    %229 = vmatpush1.msra.mxu0 0.0
    %230 = vmatprep.subr.mxu0 0.0
    %231 = vmatpush1.msra.mxu0 0.0
    %232 = vmatprep.subr.mxu0 0.0
    %233 = vmatpush1.msra.mxu0 0.0
    %234 = vmatprep.subr.mxu0 0.0
    %235 = vmatpush1.msra.mxu0 0.0
    %236 = vmatprep.subr.mxu0 0.0
    %237 = vmatpush1.msra.mxu0 0.0
    %238 = vmatprep.subr.mxu0 0.0
    %239 = vmatpush1.msra.mxu0 0.0
    %240 = vmatprep.subr.mxu0 0.0
    %241 = vmatpush1.msra.mxu0 0.0
    %242 = vmatprep.subr.mxu0 0.0
    %243 = vmatpush1.msra.mxu0 0.0
    %244 = vmatprep.subr.mxu0 0.0
    %245 = vmatpush1.msra.mxu0 0.0
    %246 = vmatprep.subr.mxu0 0.0
    %247 = vmatpush1.msra.mxu0 0.0
    %248 = vmatprep.subr.mxu0 0.0
    %249 = vmatpush1.msra.mxu0 0.0
    %250 = vmatprep.subr.mxu0 0.0
    %251 = vmatpush1.msra.mxu0 0.0
    %252 = vmatprep.subr.mxu0 0.0
    %253 = vmatpush1.msra.mxu0 0.0
    %254 = vmatprep.subr.mxu0 0.0
    %255 = vmatpush1.msra.mxu0 0.0
    %256 = vmatprep.mubr.f32.mxu0 0.0
    %257 = vmatmul.mubr.f32.gmra.mrb[0].mxu0 %v167
    %v258 = vpop.f32.mrb[0].mxu0
    %v259 = vadd.f32 %v190, %v258
    %v260 = vpop.f32.mrb[0].mxu0
    %261 = vmatprep.mubr.f32.mxu0 0.0
    %262 = vmatmul.mubr.f32.gmra.mrb[0].mxu0 %v168
    %v263 = vpop.f32.mrb[0].mxu0
    %v264 = vadd.f32 %v190, %v263
    %v265 = vpop.f32.mrb[0].mxu0
    %266 = vdwg.mxu0
    %267 = vst.msk [vmem:[#allocation2] sm:$0xff] %vm29, %v259
    %268 = vst.msk [vmem:[#allocation2 + $0x8] sm:$0xff] %vm29, %v264
    // Predicated region
    $region30: #{tpu_custom_call.1} parent=1 // pred_check
      _
    $region31: #{tpu_custom_call.1} parent=1 // pred_check_branch
      %270 = sbr.rel (0) target = $region33
    $region32: #{tpu_custom_call.1} parent=1 // pred_region
      %s272 = ssub.s32 256, 256
      %273 = vsyncadd [#allocation3], %s272
      %s274 = sshll.u32 [#allocation2], 4
      %s275 = int_to_ptr.vmem [resolvable:$true] %s274
      %280 = dma.vmem_to_hbm [thread:$0]  %s275, 256, %s7, [#allocation3], 128, 128, 8
    $region33: #{tpu_custom_call.1} parent=1 // pred_fallthru
      _
    // Predicated region
    $region34: #{tpu_custom_call.1} parent=1 // pred_check
      _
    $region35: #{tpu_custom_call.1} parent=1 // pred_check_branch
      %282 = sbr.rel (0) target = $region37
    $region36: #{tpu_custom_call.1} parent=1 // pred_region
      %283 = dma.done [#allocation3], 256
    $region37: #{tpu_custom_call.1} parent=1 // pred_fallthru
      _
    %284 = vsyncpa [#allocation3], 1

</llo_original>
